<compile_context>
chip_gen: v5e
topology: v5e:2x2
jax: 0.10.0
libtpu: 0.0.40
codegen_flags: <defaults>
</compile_context>

<pallas_src>
import math

import jax
import jax.numpy as jnp
from jax.experimental import pallas as pl
from jax.experimental.pallas import tpu as pltpu

_LOG2 = math.log(2.0)
_LANES = 128


def _shifted_softplus_kernel(x_ref, o_ref):
    x = x_ref[...].astype(jnp.float32)
    # Numerically stable softplus: max(x, 0) + log1p(exp(-|x|))
    sp = jnp.maximum(x, 0.0) + jnp.log1p(jnp.exp(-jnp.abs(x)))
    o_ref[...] = (sp - _LOG2).astype(o_ref.dtype)


def _round_up(a: int, b: int) -> int:
    return ((a + b - 1) // b) * b


def _target_block_bytes() -> int:
    # 4 MiB tiles on v6e/v7x (double-buffered in+out = 16 MiB, under the
    # 32 MiB scoped-VMEM default); 2 MiB on v5e / unknown chips (16 MiB
    # default scoped VMEM -> 8 MiB total, ~85% of HBM roofline already).
    try:
        kind = jax.devices()[0].device_kind.lower()
    except Exception:
        return 2 * 1024 * 1024
    if "v6" in kind or "v7" in kind:
        return 4 * 1024 * 1024
    return 2 * 1024 * 1024


def _run_2d(x2d: jax.Array, sublane: int, itemsize: int, donate: bool) -> jax.Array:
    """Run the kernel over a (rows, 128) lane-dense view."""
    rows, lanes = x2d.shape
    dtype = x2d.dtype

    target_block_bytes = _target_block_bytes()
    rows_per_block = max(
        sublane, (target_block_bytes // (lanes * itemsize)) // sublane * sublane
    )

    if rows <= sublane:
        # Too small to split: single full-extent block along rows.
        block_rows = rows
    else:
        # At least 2 grid steps when possible so v7x can shard across both
        # TensorCores, capped at the target block size for large inputs.
        half_rows = max(sublane, _round_up(pl.cdiv(rows, 2), sublane))
        block_rows = min(rows_per_block, half_rows)

    grid = (pl.cdiv(rows, block_rows),)

    return pl.pallas_call(
        _shifted_softplus_kernel,
        out_shape=jax.ShapeDtypeStruct((rows, lanes), dtype),
        grid=grid,
        # NOTE: if xprof ever shows exposed DMA at grid-step boundaries, add
        # pipeline_mode=pl.Buffered(3) on the input spec and sweep 2 vs 3.
        in_specs=[pl.BlockSpec((block_rows, lanes), lambda i: (i, 0))],
        out_specs=pl.BlockSpec((block_rows, lanes), lambda i: (i, 0)),
        compiler_params=pltpu.CompilerParams(
            dimension_semantics=("parallel",)
        ),
        input_output_aliases=({0: 0} if donate else {}),
    )(x2d)


def shifted_softplus(x: jax.Array, donate: bool = False) -> jax.Array:
    """Apply softplus(x) - log(2) elementwise via a Pallas TPU kernel.

    Set donate=True only when the caller's input buffer may be reused
    (e.g. under jit with the argument donated); it aliases the output onto
    the input's HBM allocation.
    """
    orig_shape = x.shape
    dtype = x.dtype
    n = x.size
    if n == 0:
        return x

    itemsize = jnp.dtype(dtype).itemsize
    sublane = {4: 8, 2: 16, 1: 32}.get(itemsize, 8)

    flat = x.reshape(-1)  # bitcast, no copy
    tail = n % _LANES
    main_n = n - tail

    if tail == 0:
        out2d = _run_2d(flat.reshape(-1, _LANES), sublane, itemsize, donate)
        return out2d.reshape(orig_shape)

    if main_n == 0:
        # Degenerate tiny input (< 128 elements): a kernel launch is all
        # overhead; plain jnp is exact and cheaper.
        out = (jax.nn.softplus(flat.astype(jnp.float32)) - _LOG2).astype(dtype)
        return out.reshape(orig_shape)

    # Non-divisible size: kernel over the full 128-wide rows (Pallas masks the
    # partial last *block* automatically); the <128-element sub-row tail is
    # computed with plain jnp.  This avoids the old pad + [:n] round-trips.
    main_out = _run_2d(
        flat[:main_n].reshape(-1, _LANES), sublane, itemsize, donate
    )
    tail_f32 = flat[main_n:].astype(jnp.float32)
    tail_out = (jax.nn.softplus(tail_f32) - _LOG2).astype(dtype)
    return jnp.concatenate([main_out.reshape(-1), tail_out]).reshape(orig_shape)


if __name__ == "__main__":
    key = jax.random.PRNGKey(0)

    # Primary check: small NCHW f32 input (n divisible by 128 -> clean path,
    # grid of 2 so both v7x TensorCores get a shard).
    x = jax.random.normal(key, (2, 4, 16, 16), dtype=jnp.float32) * 5.0
    out = shifted_softplus(x)
    jax.block_until_ready(out)
    ref = jax.nn.softplus(x) - _LOG2
    assert out.shape == x.shape and out.dtype == x.dtype
    assert jnp.allclose(out, ref, atol=1e-5, rtol=1e-5)

    # Secondary check: odd shape exercising the pad-free tail path
    # (n = 4845, 37 full rows in-kernel + 109-element jnp tail).
    k1, k2 = jax.random.split(key)
    x2 = jax.random.normal(k1, (3, 5, 19, 17), dtype=jnp.float32) * 3.0
    out2 = shifted_softplus(x2)
    jax.block_until_ready(out2)
    ref2 = jax.nn.softplus(x2) - _LOG2
    assert out2.shape == x2.shape
    assert jnp.allclose(out2, ref2, atol=1e-5, rtol=1e-5)

    # Third check: bf16 input (computed in f32 inside the kernel).
    x3 = (jax.random.normal(k2, (4, 16, 32), dtype=jnp.float32) * 4.0).astype(
        jnp.bfloat16
    )
    out3 = shifted_softplus(x3)
    jax.block_until_ready(out3)
    ref3 = jax.nn.softplus(x3.astype(jnp.float32)) - _LOG2
    assert out3.dtype == jnp.bfloat16
    assert jnp.allclose(out3.astype(jnp.float32), ref3, atol=2e-2, rtol=2e-2)

    print("KERNEL_OK")
</pallas_src>

<mosaic_0001>
module attributes {stable_mosaic.version = 11 : i64} {
  func.func @_shifted_softplus_kernel(%arg0: i32, %arg1: memref<8x128xf32, #tpu.memory_space<vmem>>, %arg2: memref<8x128xf32, #tpu.memory_space<vmem>>) attributes {dimension_semantics = [#tpu.dimension_semantics<parallel>], iteration_bounds = array<i64: 2>, scalar_prefetch = 0 : i64, scratch_operands = 0 : i64, tpu.core_type = #tpu.core_type<tc>, window_params = [{transform_indices = @transform_0, window_bounds = array<i64: 8, 128>}, {transform_indices = @transform_1, window_bounds = array<i64: 8, 128>}]} {
    %c0 = arith.constant 0 : index
    %c0_0 = arith.constant 0 : index
    %0 = vector.load %arg1[%c0, %c0_0] : memref<8x128xf32, #tpu.memory_space<vmem>>, vector<8x128xf32>
    %cst = arith.constant 0.000000e+00 : f32
    %1 = vector.broadcast %cst : f32 to vector<8x128xf32>
    %2 = arith.maximumf %0, %1 : vector<8x128xf32>
    %3 = math.absf %0 : vector<8x128xf32>
    %cst_1 = arith.constant 0.000000e+00 : f32
    %4 = vector.broadcast %cst_1 : f32 to vector<8x128xf32>
    %5 = arith.subf %4, %3 : vector<8x128xf32>
    %6 = math.exp %5 : vector<8x128xf32>
    %7 = math.log1p %6 : vector<8x128xf32>
    %8 = arith.addf %2, %7 : vector<8x128xf32>
    %cst_2 = arith.constant 0.693147182 : f32
    %9 = vector.broadcast %cst_2 : f32 to vector<8x128xf32>
    %10 = arith.subf %8, %9 : vector<8x128xf32>
    %c0_3 = arith.constant 0 : index
    %c0_4 = arith.constant 0 : index
    %11 = vector.load %arg2[%c0_3, %c0_4] : memref<8x128xf32, #tpu.memory_space<vmem>>, vector<8x128xf32>
    tpu.vector_store %arg2[%c0_3, %c0_4], %10 {strides = array<i32>} : memref<8x128xf32, #tpu.memory_space<vmem>>, vector<8x128xf32>,
    return
  }
  func.func @transform_0(%arg0: i32) -> (i32, i32) {
    %c0_i32 = arith.constant 0 : i32
    %c0_i32_0 = arith.constant 0 : i32
    return %arg0, %c0_i32 : i32, i32
  }
  func.func @transform_1(%arg0: i32) -> (i32, i32) {
    %c0_i32 = arith.constant 0 : i32
    %c0_i32_0 = arith.constant 0 : i32
    return %arg0, %c0_i32 : i32, i32
  }
}

</mosaic_0001>

<llo_original>
// kernel: tpu_custom_call.1
$region0: #{tpu_custom_call.1}
  #allocation0 [shape = 'u32[]', space=smem, size = 0x4, offset = 0x4, fixed_abs, tag = 'smem constant byte address 0x4 - core index']
  #allocation1 [shape = 'u32[72,128]{1,0:T(1,128)}', space=vmem, size = 0x9000, scoped, tag = 'internal scratch']
  %s0 = inlined_call_operand.hbm [shape: f32[16,128], index: 0, kind: input, shape index: {}]
  %s1 = inlined_call_operand.hbm [shape: f32[16,128], index: 1, kind: output, shape index: {}]
  %s2 = sld [smem:[#allocation0]]
  $region41: #{tpu_custom_call.1} parent=0
    _
  %s4 = ssub.s32 1, %s2
  %s5 = scalar_select 0, %s4, %s2
  $region1: #{tpu_custom_call.1} parent=0
    #allocation2 [shape = 'u8[8192]{0}', space=vmem, size = 0x2000, scoped, tag = 'input window, operand 0']
    #allocation3 [shape = 's32[2]{0}', space=sflag, size = 0x8, scoped, tag = 'scoped memory for tpu_custom_call.1']
    #allocation4 [shape = 's32[2]{0}', space=sflag, size = 0x8, scoped, tag = 'scoped memory for tpu_custom_call.1']
    #allocation5 [shape = 'u8[8192]{0}', space=vmem, size = 0x2000, scoped, tag = 'output window, operand 0']
    %6 = vsyncpa [#allocation3], 0
    %s7 = scalar_lea.sflag [#allocation3], 1
    %8 = vsyncpa %s7, 0
    %9 = vsyncpa [#allocation4], 0
    %s10 = scalar_lea.sflag [#allocation4], 1
    %11 = vsyncpa %s10, 0
    loop: start=0, step=1, limit=4
    $region2: #{tpu_custom_call.1} parent=1 // loop_pre_header
      _
    $region3: #{tpu_custom_call.1} parent=1 // loop_header
      %s13 = sphi 0, %s17
      %p14 = scmp.ge.s32.totalorder %s13, 4
      %s23 = sphi 0, %s25
      %s26 = sphi 0, %s23
      %s27 = sphi 0, %s26
      %s43 = sphi 0, %s27
      %s49 = sphi 0, %s51
      %s52 = sphi 0, %s49
      %s53 = sphi 0, %s52
      %s69 = sphi 0, %s53
    $region4: #{tpu_custom_call.1} parent=1 // loop_header_branch
      %16 = sbr.rel (%p14) target = $region8
    $region5: #{tpu_custom_call.1} parent=1 // loop_body
      %s18 = ssub.s32 %s13, 1
      %s19 = ssub.s32 %s13, 2
      %s20 = sadd.s32 %s13, 1
      %s21 = ssub.s32 %s13, %s20
      %p22 = scmp.eq.s32.totalorder %s21, 0
      %s24 = sadd.s32 %s23, 1
      %s25 = scalar_select %p22, %s23, %s24
      %p28 = pneg %p22
      %p29 = scmp.eq.s32.totalorder %s13, 1
      %p30 = por %p28, %p29
      %p31 = scmp.ne.s32.totalorder %s23, %s26
      %p32 = scmp.eq.s32.totalorder %s13, 0
      %p33 = por %p31, %p32
      %p34 = scmp.ne.s32.totalorder %s23, %s26
      %p35 = scmp.eq.s32.totalorder %s18, 1
      %p36 = por %p34, %p35
      %p37 = scmp.ne.s32.totalorder %s26, %s27
      %p38 = scmp.eq.s32.totalorder %s18, 0
      %p39 = por %p37, %p38
      %p40 = scmp.ne.s32.totalorder %s26, %s27
      %p41 = scmp.eq.s32.totalorder %s19, 1
      %p42 = por %p40, %p41
      %p44 = scmp.ne.s32.totalorder %s27, %s43
      %p45 = scmp.eq.s32.totalorder %s19, 0
      %p46 = por %p44, %p45
      %s47 = ssub.s32 %s13, %s20
      %p48 = scmp.eq.s32.totalorder %s47, 0
      %s50 = sadd.s32 %s49, 1
      %s51 = scalar_select %p48, %s49, %s50
      %p54 = pneg %p48
      %p55 = scmp.eq.s32.totalorder %s13, 1
      %p56 = por %p54, %p55
      %p57 = scmp.ne.s32.totalorder %s49, %s52
      %p58 = scmp.eq.s32.totalorder %s13, 0
      %p59 = por %p57, %p58
      %p60 = scmp.ne.s32.totalorder %s49, %s52
      %p61 = scmp.eq.s32.totalorder %s18, 1
      %p62 = por %p60, %p61
      %p63 = scmp.ne.s32.totalorder %s52, %s53
      %p64 = scmp.eq.s32.totalorder %s18, 0
      %p65 = por %p63, %p64
      %p66 = scmp.ne.s32.totalorder %s52, %s53
      %p67 = scmp.eq.s32.totalorder %s19, 1
      %p68 = por %p66, %p67
      %p70 = scmp.ne.s32.totalorder %s53, %s69
      %p71 = scmp.eq.s32.totalorder %s19, 0
      %p72 = por %p70, %p71
      %p73 = scmp.le.s32.totalorder 1, %s13
      %p74 = scmp.lt.s32.totalorder %s13, 3
      %p75 = pnand %p73, %p74
      %p76 = pneg %p75
      // Predicated region
      $region9: #{tpu_custom_call.1} parent=5 // pred_check
        _
      $region10: #{tpu_custom_call.1} parent=5 // pred_check_branch
        %78 = sbr.rel (%p75) target = $region12
      $region11: #{tpu_custom_call.1} parent=5 // pred_region
        %s79 = ssub.s32 %s13, 1
      $region12: #{tpu_custom_call.1} parent=5 // pred_fallthru
        _
      %p80 = scmp.lt.s32.totalorder %s13, 2
      // Predicated region
      $region13: #{tpu_custom_call.1} parent=5 // pred_check
        %p81 = pneg %p80
      $region14: #{tpu_custom_call.1} parent=5 // pred_check_branch
        %83 = sbr.rel (%p81) target = $region16
      $region15: #{tpu_custom_call.1} parent=5 // pred_region
        // Predicated region
        $region17: #{tpu_custom_call.1} parent=15 // pred_check
          %p84 = pneg %p33
        $region18: #{tpu_custom_call.1} parent=15 // pred_check_branch
          %86 = sbr.rel (%p84) target = $region20
        $region19: #{tpu_custom_call.1} parent=15 // pred_region
          %s87 = sand.u32 %s23, 1
          %s88 = scalar_lea.sflag [#allocation3], %s87
          %s89 = sand.u32 %s23, 1
          %s90 = smul.addr %s89, 8
          %s91 = scalar_lea.vmem [#allocation2], %s90
          %93 = vsyncadd %s88, 0
          %s94 = smul.addr %s13, 8
          %s95 = scalar_lea.hbm %s0, %s94
          %s97 = sshll.u32 %s95, 4
          %s98 = int_to_ptr.hbm [resolvable:$true] %s97
          %s99 = sshll.u32 %s91, 4
          %s100 = int_to_ptr.vmem [resolvable:$true] %s99
          %102 = dma.hbm_to_vmem [thread:$0]  %s98, 128, %s100, %s88
        $region20: #{tpu_custom_call.1} parent=15 // pred_fallthru
          _
      $region16: #{tpu_custom_call.1} parent=5 // pred_fallthru
        _
      %p103 = scmp.le.s32.totalorder 1, %s13
      %p104 = scmp.lt.s32.totalorder %s13, 3
      %p105 = pnand %p103, %p104
      %p106 = pneg %p105
      // Predicated region
      $region21: #{tpu_custom_call.1} parent=5 // pred_check
        _
      $region22: #{tpu_custom_call.1} parent=5 // pred_check_branch
        %108 = sbr.rel (%p105) target = $region24
      $region23: #{tpu_custom_call.1} parent=5 // pred_region
        %s109 = ssub.s32 %s13, 1
        %s110 = sand.u32 %s26, 1
        %s111 = scalar_lea.sflag [#allocation3], %s110
        %s112 = sand.u32 %s26, 1
        %s113 = smul.addr %s112, 8
        %s114 = scalar_lea.vmem [#allocation2], %s113
        // Predicated region
        $region25: #{tpu_custom_call.1} parent=23 // pred_check
          %p115 = pneg %p39
        $region26: #{tpu_custom_call.1} parent=23 // pred_check_branch
          %117 = sbr.rel (%p115) target = $region28
        $region27: #{tpu_custom_call.1} parent=23 // pred_region
          %119 = dma.done %s111, 128
        $region28: #{tpu_custom_call.1} parent=23 // pred_fallthru
          _
        %s120 = sand.u32 %s26, 1
        %s121 = scalar_lea.sflag [#allocation3], %s120
        %s122 = sand.u32 %s26, 1
        %s123 = smul.addr %s122, 8
        %s124 = scalar_lea.vmem [#allocation2], %s123
        %p125 = pneg %p39
        %p126 = pneg %p36
        %p127 = pneg %p65
        %p128 = pneg %p62
        %s129 = sand.u32 %s52, 1
        %s130 = scalar_lea.sflag [#allocation4], %s129
        %s131 = sand.u32 %s52, 1
        %s132 = smul.addr %s131, 8
        %s133 = scalar_lea.vmem [#allocation5], %s132
        %v134 = vld [vmem:[%s114] sm:$0xff]
        %v135 = vmax.f32 %v134, 0.0
        %v136 = vand.u32 2147483647, %v134
        %v137 = vsub.f32 0.0, %v136
        %v138 = vmul.f32 %v137, 1.442695
        %v139 = vpow.pop %v138
        %v140 = vadd.f32 %v139, 1.0
        %v141 = vlog2.pop %v140
        %v142 = vmul.f32 %v141, 0.6931472
        %v143 = vmul.f32 -0.5, %v139
        %v144 = vadd.f32 %v143, 1.0
        %v145 = vmul.f32 %v144, %v139
        %v146 = vand.u32 2147483647, %v139
        %vm147 = vcmp.lt.f32.partialorder %v146, 0.0004427343
        %v148 = vsel %vm147, %v145, %v142
        %v149 = vadd.f32 %v135, %v148
        %v150 = vsub.f32 %v149, 0.6931472
        %151 = vst [vmem:[%s133] sm:$0xff] %v150
        %s152 = sand.u32 %s52, 1
        %s153 = scalar_lea.sflag [#allocation4], %s152
        %s154 = sand.u32 %s52, 1
        %s155 = smul.addr %s154, 8
        %s156 = scalar_lea.vmem [#allocation5], %s155
        // Predicated region
        $region29: #{tpu_custom_call.1} parent=23 // pred_check
          %p157 = pneg %p62
        $region30: #{tpu_custom_call.1} parent=23 // pred_check_branch
          %159 = sbr.rel (%p157) target = $region32
        $region31: #{tpu_custom_call.1} parent=23 // pred_region
          %161 = vsyncadd %s153, 0
          %s162 = smul.addr %s18, 8
          %s163 = scalar_lea.hbm %s1, %s162
          %s165 = sshll.u32 %s156, 4
          %s166 = int_to_ptr.vmem [resolvable:$true] %s165
          %s167 = sshll.u32 %s163, 4
          %s168 = int_to_ptr.hbm [resolvable:$true] %s167
          %170 = dma.vmem_to_hbm [thread:$0]  %s166, 128, %s168, %s153
        $region32: #{tpu_custom_call.1} parent=23 // pred_fallthru
          _
      $region24: #{tpu_custom_call.1} parent=5 // pred_fallthru
        _
      %p171 = scmp.le.s32.totalorder 2, %s13
      // Predicated region
      $region33: #{tpu_custom_call.1} parent=5 // pred_check
        %p172 = pneg %p171
      $region34: #{tpu_custom_call.1} parent=5 // pred_check_branch
        %174 = sbr.rel (%p172) target = $region36
      $region35: #{tpu_custom_call.1} parent=5 // pred_region
        %s175 = ssub.s32 %s13, 2
        // Predicated region
        $region37: #{tpu_custom_call.1} parent=35 // pred_check
          %p176 = pneg %p68
        $region38: #{tpu_custom_call.1} parent=35 // pred_check_branch
          %178 = sbr.rel (%p176) target = $region40
        $region39: #{tpu_custom_call.1} parent=35 // pred_region
          %s179 = sand.u32 %s53, 1
          %s180 = scalar_lea.sflag [#allocation4], %s179
          %s181 = sand.u32 %s53, 1
          %s182 = smul.addr %s181, 8
          %s183 = scalar_lea.vmem [#allocation5], %s182
          %185 = dma.done %s180, 128
        $region40: #{tpu_custom_call.1} parent=35 // pred_fallthru
          _
      $region36: #{tpu_custom_call.1} parent=5 // pred_fallthru
        _
    $region6: #{tpu_custom_call.1} parent=1 // loop_footer
      %s17 = sadd.s32 1, %s13
    $region7: #{tpu_custom_call.1} parent=1 // loop_footer_branch
      %12 = sbr.rel target = $region3
    $region8: #{tpu_custom_call.1} parent=1 // loop_exit
      _
    %186 = vsyncpa [#allocation3], 1
    %s187 = scalar_lea.sflag [#allocation3], 1
    %188 = vsyncpa %s187, 1
    %189 = vsyncpa [#allocation4], 1
    %s190 = scalar_lea.sflag [#allocation4], 1
    %191 = vsyncpa %s190, 1

</llo_original>
